<compile_context>
chip_gen: v7x
topology: tpu7x:2x2x1
jax: 0.10.0
libtpu: 0.0.40
codegen_flags: <defaults>
</compile_context>

<pallas_src>
import functools

import jax
import jax.numpy as jnp
from jax import lax
from jax.experimental import pallas as pl
from jax.experimental.pallas import tpu as pltpu

NUM_CLASSES = 10
CW_MARGIN = 50.0
LANE = 128
NEG_BIG = -1e30


def _round_up(n, m):
    return ((n + m - 1) // m) * m


def _pad_rows(a, rows):
    pad = rows - a.shape[0]
    if pad == 0:
        return a
    return jnp.pad(a, ((0, pad),) + ((0, 0),) * (a.ndim - 1))


@functools.lru_cache(maxsize=None)
def _vmem_budget_bytes():
    """Per-generation VMEM working-set target (<= half of physical VMEM)."""
    phys = 64 << 20
    try:
        info = pltpu.get_tpu_info()
        cap = int(getattr(info, "vmem_capacity_bytes", 0))
        if cap > 0:
            phys = cap
    except Exception:
        pass
    return min(phys // 2, 64 << 20)


def _batch_tiling(batch, d, *, slabs, fixed_bytes, prefer_split=True):
    """VMEM-aware batch tile.

    `slabs` ~= number of live (TB, D) f32 slabs (double-buffered inputs /
    outputs plus in-loop temporaries); `fixed_bytes` covers the VMEM-resident
    weights.  Returns (TB, padded batch, num blocks, vmem_limit_bytes).
    """
    budget = _vmem_budget_bytes()
    avail = max(budget - fixed_bytes, 2 << 20)
    tb_cap = max(8, (avail // (slabs * 4 * max(d, 1))) // 8 * 8)
    tb = min(tb_cap, 512, _round_up(batch, 8))
    if prefer_split and batch > 8:
        # >= 2 batch blocks so the 'parallel' axis can shard across both v7x
        # TensorCores; on 1-TC chips the extra grid step costs ~0.35 us.
        tb = min(tb, _round_up((batch + 1) // 2, 8))
    tb = max(tb, 8)
    bp = _round_up(batch, tb)
    need = fixed_bytes + slabs * 4 * d * tb + (4 << 20)
    vmem_limit = int(min(max(budget + budget // 4, need), 112 << 20))
    return tb, bp, bp // tb, vmem_limit


# ----------------------------------------------------------------------------
# Kernel 1: linear forward (optionally fused log_softmax)  -- the mode_forward
# hot path:  logits = x_flat @ W_pad + b_pad   [, log_softmax(logits)]
# Class axis is padded to 128 (lane-dense output tile); padded bias = -1e30.
# Kept f32 end-to-end so mode_forward matches the reference head exactly.
# ----------------------------------------------------------------------------
def _forward_kernel(x_ref, w_ref, b_ref, out_ref, *, log_softmax):
    logits = jnp.dot(x_ref[...], w_ref[...],
                     preferred_element_type=jnp.float32) + b_ref[...]
    if log_softmax:
        m = jnp.max(logits, axis=-1, keepdims=True)
        s = logits - m
        lse = jnp.log(jnp.sum(jnp.exp(s), axis=-1, keepdims=True))
        logits = s - lse
    out_ref[...] = logits


def linear_forward(x_flat, w_pad, b_pad, *, log_softmax=False):
    B, D = x_flat.shape
    Kp = w_pad.shape[1]
    TB, Bp, nblk, vmem_limit = _batch_tiling(
        B, D, slabs=4, fixed_bytes=2 * D * Kp * 4)
    xp = _pad_rows(x_flat, Bp)
    kern = functools.partial(_forward_kernel, log_softmax=log_softmax)
    out = pl.pallas_call(
        kern,
        out_shape=jax.ShapeDtypeStruct((Bp, Kp), jnp.float32),
        grid=(nblk,),
        in_specs=[
            pl.BlockSpec((TB, D), lambda i: (i, 0)),
            pl.BlockSpec((D, Kp), lambda i: (0, 0)),
            pl.BlockSpec((1, Kp), lambda i: (0, 0)),
        ],
        out_specs=pl.BlockSpec((TB, Kp), lambda i: (i, 0)),
        compiler_params=pltpu.CompilerParams(
            dimension_semantics=("parallel",),
            vmem_limit_bytes=vmem_limit),
    )(xp, w_pad, b_pad)
    return out[:B]                       # still class-padded; caller slices


# ----------------------------------------------------------------------------
# Kernel 2: fully fused PGD attack ('ce' / 'pgd' / 'fgsm').
#   All `iters` steps run inside one kernel; x_adv, x_nat, W, W^T, b and the
#   one-hot stay in VMEM.  The CE-loss *gradient* is computed analytically:
#     grad_logits = loss_sign * (softmax(logits) - onehot)     (loss_sign=-1
#                                                               for 'towards')
#     grad_x      = grad_logits @ W^T          (W^T is a pre-transposed input,
#                                               so no per-iteration transpose)
#     x_adv       = min(max(x_adv + step*sign(grad_x), lo), hi)
#   with lo = max(x_nat-eps, 0), hi = min(x_nat+eps, 1) hoisted out of the loop
#   (equivalent to the reference min/max-then-clamp for x_nat in [0,1]).
#   Matmuls inside the loop use bf16 operands + f32 accumulation; the optional
#   tail forward + log_softmax stays f32.
# ----------------------------------------------------------------------------
def _fused_pgd_kernel(y_ref, xadv0_ref, xnat_ref, w_ref, wt_ref, b_ref,
                      *out_refs, iters, step_size, epsilon, loss_sign,
                      emit_adv, emit_logp, unroll):
    TB, D = xnat_ref.shape
    Kp = w_ref.shape[1]
    w = w_ref[...]                      # f32, kept for the f32 tail forward
    b = b_ref[...]                      # f32 (-1e30 padded bias must stay f32)
    w_mm = w.astype(jnp.bfloat16)       # bf16 MXU operands, hoisted
    wt_mm = wt_ref[...].astype(jnp.bfloat16)
    xn = xnat_ref[...]
    lo = jnp.maximum(xn - epsilon, 0.0)  # clamp bounds hoisted out of the loop
    hi = jnp.minimum(xn + epsilon, 1.0)
    # one-hot built in-kernel from int32 labels (padded classes stay 0; padded
    # batch rows carry label 0 -> harmless wasted work, sliced off by caller)
    onehot = (y_ref[...] ==
              lax.broadcasted_iota(jnp.int32, (TB, Kp), 1)).astype(jnp.float32)

    def pgd_step(_, x):
        logits = jnp.dot(x.astype(jnp.bfloat16), w_mm,
                         preferred_element_type=jnp.float32) + b
        m = jnp.max(logits, axis=-1, keepdims=True)
        e = jnp.exp(logits - m)
        p = e * pl.reciprocal(jnp.sum(e, axis=-1, keepdims=True), approx=True)
        g = (loss_sign * (p - onehot)).astype(jnp.bfloat16)
        grad_x = jnp.dot(g, wt_mm, preferred_element_type=jnp.float32)
        x_new = x + step_size * jnp.sign(grad_x)
        return jnp.minimum(jnp.maximum(x_new, lo), hi)

    x_adv = lax.fori_loop(0, iters, pgd_step, xadv0_ref[...], unroll=unroll)

    idx = 0
    if emit_adv:
        out_refs[idx][...] = x_adv
        idx += 1
    if emit_logp:
        # fused final forward + log_softmax in f32 (padded classes have bias
        # -1e30 -> zero probability mass, so real-class log-probs are exact).
        logits = jnp.dot(x_adv, w, preferred_element_type=jnp.float32) + b
        m = jnp.max(logits, axis=-1, keepdims=True)
        s = logits - m
        lse = jnp.log(jnp.sum(jnp.exp(s), axis=-1, keepdims=True))
        out_refs[idx][...] = s - lse


def fused_pgd_attack(x_adv0, x_nat, y, w_pad, wt_pad, b_pad, *,
                     iters, step_size, epsilon, loss_sign,
                     emit_adv=True, emit_logp=False):
    assert emit_adv or emit_logp
    B, D = x_adv0.shape
    Kp = w_pad.shape[1]
    slabs = 10 if emit_adv else 8
    TB, Bp, nblk, vmem_limit = _batch_tiling(
        B, D, slabs=slabs, fixed_bytes=4 * D * Kp * 4 + 2 * D * Kp * 2)
    x_adv0p = _pad_rows(x_adv0, Bp)
    x_natp = _pad_rows(x_nat, Bp)
    yp = _pad_rows(y.astype(jnp.int32).reshape(B, 1), Bp)

    out_shapes, out_specs = [], []
    if emit_adv:
        out_shapes.append(jax.ShapeDtypeStruct((Bp, D), jnp.float32))
        out_specs.append(pl.BlockSpec((TB, D), lambda i: (i, 0)))
    if emit_logp:
        out_shapes.append(jax.ShapeDtypeStruct((Bp, Kp), jnp.float32))
        out_specs.append(pl.BlockSpec((TB, Kp), lambda i: (i, 0)))

    unroll = True if int(iters) <= 8 else 4
    kern = functools.partial(_fused_pgd_kernel, iters=int(iters),
                             step_size=float(step_size),
                             epsilon=float(epsilon),
                             loss_sign=float(loss_sign),
                             emit_adv=emit_adv, emit_logp=emit_logp,
                             unroll=unroll)
    res = pl.pallas_call(
        kern,
        out_shape=tuple(out_shapes),
        grid=(nblk,),
        in_specs=[
            pl.BlockSpec((TB, 1), lambda i: (i, 0)),
            pl.BlockSpec((TB, D), lambda i: (i, 0)),
            pl.BlockSpec((TB, D), lambda i: (i, 0)),
            pl.BlockSpec((D, Kp), lambda i: (0, 0)),
            pl.BlockSpec((Kp, D), lambda i: (0, 0)),
            pl.BlockSpec((1, Kp), lambda i: (0, 0)),
        ],
        out_specs=tuple(out_specs),
        compiler_params=pltpu.CompilerParams(
            dimension_semantics=("parallel",),
            vmem_limit_bytes=vmem_limit),
    )(yp, x_adv0p, x_natp, w_pad, wt_pad, b_pad)
    if not isinstance(res, (tuple, list)):
        res = (res,)
    adv = logp = None
    idx = 0
    if emit_adv:
        adv = res[idx][:B]
        idx += 1
    if emit_logp:
        logp = res[idx][:B]
    return adv, logp


# ----------------------------------------------------------------------------
# Kernel 2b: forward_api fast path (random_start='zero').
#   2-D grid (batch_block, class).  x_nat's index_map ignores the class axis,
#   so each image block is DMA'd once and stays VMEM-resident across all K
#   per-class attacks; the one-hot is built from the class grid index.  Only
#   the per-class log-probs are written back (the adv images are never needed).
# ----------------------------------------------------------------------------
def _api_pgd_kernel(xnat_ref, w_ref, wt_ref, b_ref, logp_ref, *,
                    iters, step_size, epsilon, loss_sign, unroll):
    TB, D = xnat_ref.shape
    Kp = w_ref.shape[1]
    cls = pl.program_id(1)                      # fake target class
    w = w_ref[...]
    b = b_ref[...]
    w_mm = w.astype(jnp.bfloat16)
    wt_mm = wt_ref[...].astype(jnp.bfloat16)
    xn = xnat_ref[...]
    lo = jnp.maximum(xn - epsilon, 0.0)
    hi = jnp.minimum(xn + epsilon, 1.0)
    onehot = (cls ==
              lax.broadcasted_iota(jnp.int32, (TB, Kp), 1)).astype(jnp.float32)

    def pgd_step(_, x):
        logits = jnp.dot(x.astype(jnp.bfloat16), w_mm,
                         preferred_element_type=jnp.float32) + b
        m = jnp.max(logits, axis=-1, keepdims=True)
        e = jnp.exp(logits - m)
        p = e * pl.reciprocal(jnp.sum(e, axis=-1, keepdims=True), approx=True)
        g = (loss_sign * (p - onehot)).astype(jnp.bfloat16)
        grad_x = jnp.dot(g, wt_mm, preferred_element_type=jnp.float32)
        return jnp.minimum(jnp.maximum(x + step_size * jnp.sign(grad_x), lo), hi)

    x_adv = lax.fori_loop(0, iters, pgd_step, xn, unroll=unroll)

    logits = jnp.dot(x_adv, w, preferred_element_type=jnp.float32) + b  # f32 tail
    m = jnp.max(logits, axis=-1, keepdims=True)
    s = logits - m
    lse = jnp.log(jnp.sum(jnp.exp(s), axis=-1, keepdims=True))
    logp_ref[0, :, :] = s - lse


def fused_pgd_attack_api(x_nat, num_classes, w_pad, wt_pad, b_pad, *,
                         iters, step_size, epsilon, loss_sign):
    B, D = x_nat.shape
    Kp = w_pad.shape[1]
    # class grid axis already gives >= num_classes parallel blocks -> no need
    # to force a batch split for megacore.
    TB, Bp, nblk, vmem_limit = _batch_tiling(
        B, D, slabs=8, fixed_bytes=4 * D * Kp * 4 + 2 * D * Kp * 2,
        prefer_split=False)
    xnp = _pad_rows(x_nat, Bp)
    unroll = True if int(iters) <= 8 else 4
    kern = functools.partial(_api_pgd_kernel, iters=int(iters),
                             step_size=float(step_size),
                             epsilon=float(epsilon),
                             loss_sign=float(loss_sign), unroll=unroll)
    logp = pl.pallas_call(
        kern,
        out_shape=jax.ShapeDtypeStruct((num_classes, Bp, Kp), jnp.float32),
        grid=(nblk, num_classes),       # batch outer: x block DMA'd once per b
        in_specs=[
            pl.BlockSpec((TB, D), lambda bi, c: (bi, 0)),
            pl.BlockSpec((D, Kp), lambda bi, c: (0, 0)),
            pl.BlockSpec((Kp, D), lambda bi, c: (0, 0)),
            pl.BlockSpec((1, Kp), lambda bi, c: (0, 0)),
        ],
        out_specs=pl.BlockSpec((1, TB, Kp), lambda bi, c: (c, bi, 0)),
        compiler_params=pltpu.CompilerParams(
            dimension_semantics=("parallel", "parallel"),
            vmem_limit_bytes=vmem_limit),
    )(xnp, w_pad, wt_pad, b_pad)
    return logp[:, :B, :]               # (K, B, Kp), still class-padded


# ----------------------------------------------------------------------------
# Kernel 3: CWLoss (one-hot built in-kernel from int32 labels).  The class
# axis is lane-dense (padded to 128 with -1e30 so padded columns never win the
# `other` max and contribute 0 to the one-hot sum).
#   self  = sum(onehot * logits, dim=1)
#   other = max((1-onehot)*logits - onehot*1000, dim=1)
#   loss  = -sum(clamp(self - other + margin, 0)) [/ batch]
# ----------------------------------------------------------------------------
def _cw_loss_kernel(y_ref, logits_ref, out_ref, *, margin, reduce, batch):
    logits = logits_ref[...]
    B, K = logits.shape
    oh = (y_ref[...] ==
          lax.broadcasted_iota(jnp.int32, (B, K), 1)).astype(jnp.float32)
    self_loss = jnp.sum(oh * logits, axis=1, keepdims=True)
    other_loss = jnp.max((1.0 - oh) * logits - oh * 1000.0,
                         axis=1, keepdims=True)
    loss = -jnp.sum(jnp.maximum(self_loss - other_loss + margin, 0.0))
    if reduce:
        loss = loss / batch
    out_ref[0] = loss


def cw_loss(logits, targets, *, num_classes, margin=CW_MARGIN, reduce=True):
    del num_classes  # one-hot width follows the (padded) logits' class axis
    B, K = logits.shape
    Kp = _round_up(max(K, 1), LANE)
    if Kp != K:
        logits = jnp.pad(logits, ((0, 0), (0, Kp - K)),
                         constant_values=NEG_BIG)
    y2 = targets.astype(jnp.int32).reshape(B, 1)
    kern = functools.partial(_cw_loss_kernel, margin=float(margin),
                             reduce=reduce, batch=float(B))
    out = pl.pallas_call(
        kern,
        out_shape=jax.ShapeDtypeStruct((1,), jnp.float32),
        in_specs=[
            pl.BlockSpec((B, 1), lambda: (0, 0)),
            pl.BlockSpec((B, Kp), lambda: (0, 0)),
        ],
        out_specs=pl.BlockSpec(memory_space=pltpu.SMEM),
    )(y2, logits)
    return out[0]


# ----------------------------------------------------------------------------
# AdvModel (JAX / Pallas)
# ----------------------------------------------------------------------------
class AdvModelPallas:
    def __init__(self, num_classes, in_dim, key):
        self.num_classes = num_classes
        self.in_dim = in_dim
        kw, kb = jax.random.split(key)
        w = (jax.random.normal(kw, (in_dim, num_classes), jnp.float32)
             * (1.0 / jnp.sqrt(in_dim)))
        b = jax.random.normal(kb, (1, num_classes), jnp.float32) * 0.01
        # lane-dense class padding: zero weight columns, -1e30 bias so the
        # padded classes carry zero softmax mass and never win a max.
        kp = _round_up(num_classes, LANE)
        self.kp = kp
        self.w_pad = jnp.zeros((in_dim, kp), jnp.float32).at[:, :num_classes].set(w)
        self.wt_pad = jnp.transpose(self.w_pad)          # (Kp, D), hoists the
        # in-loop transpose out of the PGD kernel (only ~D*128*4 bytes).
        self.b_pad = jnp.full((1, kp), NEG_BIG, jnp.float32).at[:, :num_classes].set(b)

    # -- helpers -------------------------------------------------------------
    def _flatten(self, x):
        B = x.shape[0]
        return x.reshape(B, -1).astype(jnp.float32)

    @staticmethod
    def _loss_sign(params):
        atype = params['type']
        if atype not in ('ce', 'pgd', 'fgsm'):
            # TODO(synk): 'kl' and 'cw' attack gradients are not fused into the
            # Pallas step kernel; only the CE-family attacks are implemented.
            raise NotImplementedError
        direction = params['direction']
        if direction == 'towards':
            return -1.0
        if direction == 'leave':
            return 1.0
        raise NotImplementedError

    @staticmethod
    def _random_start(x_flat, random_start, epsilon, key):
        if random_start == 'zero':
            return x_flat
        if key is None:
            # TODO(synk): the reference uses stateful torch RNG per call; pass a
            # fresh `key` for genuinely different random starts per invocation.
            key = jax.random.PRNGKey(1)
        if random_start == 'eps':
            return x_flat + jax.random.uniform(
                key, x_flat.shape, jnp.float32, minval=-epsilon, maxval=epsilon)
        if random_start == 'constant':
            return x_flat + 0.001 * jax.random.normal(key, x_flat.shape,
                                                      jnp.float32)
        raise NotImplementedError

    # -- modes ---------------------------------------------------------------
    def mode_forward(self, x, *, log_softmax=False):
        out = linear_forward(self._flatten(x), self.w_pad, self.b_pad,
                             log_softmax=log_softmax)
        return out[:, :self.num_classes]

    def mode_get_adv(self, x, y, attack_params, key=None):
        B, C, H, W = x.shape
        x_nat = self._flatten(x)
        epsilon = float(attack_params['eps']) / 255.0
        step_size = float(attack_params['step_size']) / 255.0
        loss_sign = self._loss_sign(attack_params)
        x_adv0 = self._random_start(x_nat, attack_params['random_start'],
                                    epsilon, key)
        adv, _ = fused_pgd_attack(
            x_adv0, x_nat, y, self.w_pad, self.wt_pad, self.b_pad,
            iters=int(attack_params['iters']), step_size=step_size,
            epsilon=epsilon, loss_sign=loss_sign,
            emit_adv=True, emit_logp=False)
        return adv.reshape(B, C, H, W)

    def mode_forward_api(self, x, api_params, key=None):
        B = x.shape[0]
        K = self.num_classes
        x_flat = self._flatten(x)
        epsilon = float(api_params['eps']) / 255.0
        step_size = float(api_params['step_size']) / 255.0
        loss_sign = self._loss_sign(api_params)
        if api_params['random_start'] == 'zero':
            # Fast path: no K-times image duplication in HBM, one kernel launch,
            # log-probs only.  out[b, l] = log_softmax(forward(adv_l))[b, l]
            logp = fused_pgd_attack_api(
                x_flat, K, self.w_pad, self.wt_pad, self.b_pad,
                iters=int(api_params['iters']), step_size=step_size,
                epsilon=epsilon, loss_sign=loss_sign)           # (K, B, Kp)
            logp3 = logp[:, :, :K]
        else:
            # Non-zero random starts need per-(class, image) noise: fall back to
            # the stacked batch (still a single fused launch, logp-only output).
            x_stack = jnp.tile(x_flat, (K, 1))                        # (K*B, D)
            y_stack = jnp.repeat(jnp.arange(K, dtype=jnp.int32), B)
            x_adv0 = self._random_start(x_stack, api_params['random_start'],
                                        epsilon, key)
            _, logp = fused_pgd_attack(
                x_adv0, x_stack, y_stack, self.w_pad, self.wt_pad, self.b_pad,
                iters=int(api_params['iters']), step_size=step_size,
                epsilon=epsilon, loss_sign=loss_sign,
                emit_adv=False, emit_logp=True)
            logp3 = logp[:, :K].reshape(K, B, K)
        return jnp.diagonal(logp3, axis1=0, axis2=2)

    def __call__(self, x, mode, y=None, attack_params=None, api_params=None):
        if mode == 'forward':
            return self.mode_forward(x)
        elif mode == 'forward_api':
            assert api_params is not None
            return self.mode_forward_api(x, api_params)
        elif mode in ('get_adv', 'get_adv_fbda'):
            assert attack_params is not None
            return self.mode_get_adv(x, y, attack_params)
        else:
            # TODO(synk): 'get_adv_bpda' needs BPDA gradient composition through
            # the full forward_api graph; not implemented as a single kernel.
            raise NotImplementedError


if __name__ == "__main__":
    key = jax.random.PRNGKey(0)
    kx, ky, kp = jax.random.split(key, 3)

    B, C, H, W = 2, 4, 8, 8
    x = jax.random.uniform(kx, (B, C, H, W), jnp.float32)          # images in [0,1]
    y = jax.random.randint(ky, (B,), 0, NUM_CLASSES, jnp.int32)     # labels

    model = AdvModelPallas(NUM_CLASSES, in_dim=C * H * W, key=kp)

    attack_params = dict(eps=8.0, step_size=2.0, iters=5,
                         random_start='zero', type='ce', direction='towards')
    api_params = dict(eps=4.0, step_size=1.0, iters=3,
                      random_start='zero', type='ce', direction='towards')

    logits = model(x, 'forward')
    x_adv = model(x, 'get_adv', y=y, attack_params=attack_params)
    api_out = model(x, 'forward_api', api_params=api_params)
    loss = cw_loss(logits, y, num_classes=NUM_CLASSES)

    jax.block_until_ready((logits, x_adv, api_out, loss))
    assert logits.shape == (B, NUM_CLASSES)
    assert x_adv.shape == (B, C, H, W)
    assert api_out.shape == (B, NUM_CLASSES)
    assert bool(jnp.all(x_adv >= 0.0)) and bool(jnp.all(x_adv <= 1.0))
    assert bool(jnp.all(jnp.isfinite(logits)))
    assert bool(jnp.all(jnp.isfinite(api_out)))
    assert bool(jnp.isfinite(loss))
    print("KERNEL_OK")
</pallas_src>

<mosaic_0001>
module attributes {stable_mosaic.version = 11 : i64} {
  func.func @_forward_kernel(%arg0: i32, %arg1: memref<8x256xf32, #tpu.memory_space<vmem>>, %arg2: memref<256x128xf32, #tpu.memory_space<vmem>>, %arg3: memref<1x128xf32, #tpu.memory_space<vmem>>, %arg4: memref<8x128xf32, #tpu.memory_space<vmem>>) attributes {dimension_semantics = [#tpu.dimension_semantics<parallel>], iteration_bounds = array<i64: 1>, scalar_prefetch = 0 : i64, scratch_operands = 0 : i64, tpu.core_type = #tpu.core_type<tc>, window_params = [{transform_indices = @transform_0, window_bounds = array<i64: 8, 256>}, {pipeline_mode = #tpu.pipeline_mode<synchronous>, transform_indices = @transform_1, window_bounds = array<i64: 256, 128>}, {pipeline_mode = #tpu.pipeline_mode<synchronous>, transform_indices = @transform_2, window_bounds = array<i64: 1, 128>}, {transform_indices = @transform_3, window_bounds = array<i64: 8, 128>}]} {
    %c0 = arith.constant 0 : index
    %c0_0 = arith.constant 0 : index
    %0 = vector.load %arg1[%c0, %c0_0] : memref<8x256xf32, #tpu.memory_space<vmem>>, vector<8x256xf32>
    %c0_1 = arith.constant 0 : index
    %c0_2 = arith.constant 0 : index
    %1 = vector.load %arg2[%c0_1, %c0_2] : memref<256x128xf32, #tpu.memory_space<vmem>>, vector<256x128xf32>
    %cst = arith.constant dense<0.000000e+00> : vector<8x128xf32>
    %2 = tpu.matmul %0, %1, %cst {dimension_numbers = #tpu.dot_dimension_numbers<[1], [0], [0], [1], [0, 0, 1, 1], [], []>} : vector<8x256xf32>, vector<256x128xf32>, vector<8x128xf32> -> vector<8x128xf32>
    %c0_3 = arith.constant 0 : index
    %c0_4 = arith.constant 0 : index
    %3 = vector.load %arg3[%c0_3, %c0_4] : memref<1x128xf32, #tpu.memory_space<vmem>>, vector<1x128xf32>
    %4 = vector.broadcast %3 : vector<1x128xf32> to vector<8x128xf32>
    %5 = arith.addf %2, %4 : vector<8x128xf32>
    %c0_5 = arith.constant 0 : index
    %c0_6 = arith.constant 0 : index
    %6 = vector.load %arg4[%c0_5, %c0_6] : memref<8x128xf32, #tpu.memory_space<vmem>>, vector<8x128xf32>
    tpu.vector_store %arg4[%c0_5, %c0_6], %5 {strides = array<i32>} : memref<8x128xf32, #tpu.memory_space<vmem>>, vector<8x128xf32>,
    return
  }
  func.func @transform_0(%arg0: i32) -> (i32, i32) {
    %c0_i32 = arith.constant 0 : i32
    %c0_i32_0 = arith.constant 0 : i32
    return %arg0, %c0_i32 : i32, i32
  }
  func.func @transform_1(%arg0: i32) -> (i32, i32) {
    %c0_i32 = arith.constant 0 : i32
    %c0_i32_0 = arith.constant 0 : i32
    %c0_i32_1 = arith.constant 0 : i32
    return %c0_i32, %c0_i32_0 : i32, i32
  }
  func.func @transform_2(%arg0: i32) -> (i32, i32) {
    %c0_i32 = arith.constant 0 : i32
    %c0_i32_0 = arith.constant 0 : i32
    %c0_i32_1 = arith.constant 0 : i32
    return %c0_i32, %c0_i32_0 : i32, i32
  }
  func.func @transform_3(%arg0: i32) -> (i32, i32) {
    %c0_i32 = arith.constant 0 : i32
    %c0_i32_0 = arith.constant 0 : i32
    return %arg0, %c0_i32 : i32, i32
  }
}

</mosaic_0001>

<llo_original>
// kernel: tpu_custom_call.1
$region0: #{tpu_custom_call.1}
  #allocation0 [shape = 'u32[]', space=smem, size = 0x4, offset = 0x4, fixed_abs, tag = 'smem constant byte address 0x4 - core index']
  #allocation1 [shape = 'u32[144,128]{1,0:T(1,128)}', space=vmem, size = 0x12000, scoped, tag = 'internal scratch']
  %s0 = inlined_call_operand.hbm [shape: f32[8,256], index: 0, kind: input, shape index: {}]
  %s1 = inlined_call_operand.hbm [shape: f32[256,128], index: 1, kind: input, shape index: {}]
  %s2 = inlined_call_operand.vmem [shape: f32[1,128], index: 2, kind: input, shape index: {}]
  %s3 = inlined_call_operand.hbm [shape: f32[8,128], index: 3, kind: output, shape index: {}]
  %s4 = sld [smem:[#allocation0]]
  $region30: #{tpu_custom_call.1} parent=0
    _
  %s6 = ssub.s32 1, %s4
  %s7 = scalar_select 0, %s6, %s4
  $region1: #{tpu_custom_call.1} parent=0
    #allocation2 [shape = 'u8[8192]{0}', space=vmem, size = 0x2000, scoped, tag = 'input window, operand 0, single buffered']
    #allocation3 [shape = 's32[1]{0}', space=sflag, size = 0x4, scoped, tag = 'scoped memory for tpu_custom_call.1']
    #allocation4 [shape = 's32[1]{0}', space=sflag, size = 0x4, scoped, tag = 'scoped memory for tpu_custom_call.1']
    #allocation5 [shape = 'u8[131072]{0}', space=vmem, size = 0x20000, scoped, tag = 'input window, operand 1, single buffered']
    #allocation6 [shape = 's32[1]{0}', space=sflag, size = 0x4, scoped, tag = 'scoped memory for tpu_custom_call.1']
    #allocation7 [shape = 'u8[4096]{0}', space=vmem, size = 0x1000, scoped, tag = 'output window, operand 0, single buffered']
    %8 = vsyncpa [#allocation3], 0
    %9 = vsyncpa [#allocation6], 0
    %10 = vsyncpa [#allocation4], 0
    // Predicated region
    $region2: #{tpu_custom_call.1} parent=1 // pred_check
      _
    $region3: #{tpu_custom_call.1} parent=1 // pred_check_branch
      %12 = sbr.rel (0) target = $region5
    $region4: #{tpu_custom_call.1} parent=1 // pred_region
      %s14 = ssub.s32 256, 256
      %15 = vsyncadd [#allocation3], %s14
      %s17 = sshll.u32 [#allocation2], 4
      %s18 = int_to_ptr.vmem [resolvable:$true] %s17
      %20 = dma.hbm_to_vmem [thread:$0]  %s0, 256, %s18, [#allocation3]
    $region5: #{tpu_custom_call.1} parent=1 // pred_fallthru
      _
    // Predicated region
    $region6: #{tpu_custom_call.1} parent=1 // pred_check
      _
    $region7: #{tpu_custom_call.1} parent=1 // pred_check_branch
      %22 = sbr.rel (0) target = $region9
    $region8: #{tpu_custom_call.1} parent=1 // pred_region
      %s24 = ssub.s32 4096, 4096
      %25 = vsyncadd [#allocation6], %s24
      %s26 = sshll.u32 [#allocation5], 4
      %s27 = int_to_ptr.vmem [resolvable:$true] %s26
      %32 = dma.hbm_to_vmem [thread:$0]  %s1, 4096, %s27, [#allocation6], 128, 128, 8
    $region9: #{tpu_custom_call.1} parent=1 // pred_fallthru
      _
    // Predicated region
    $region10: #{tpu_custom_call.1} parent=1 // pred_check
      _
    $region11: #{tpu_custom_call.1} parent=1 // pred_check_branch
      %34 = sbr.rel (0) target = $region13
    $region12: #{tpu_custom_call.1} parent=1 // pred_region
      _
    $region13: #{tpu_custom_call.1} parent=1 // pred_fallthru
      _
    // Predicated region
    $region14: #{tpu_custom_call.1} parent=1 // pred_check
      _
    $region15: #{tpu_custom_call.1} parent=1 // pred_check_branch
      %36 = sbr.rel (0) target = $region17
    $region16: #{tpu_custom_call.1} parent=1 // pred_region
      %37 = dma.done [#allocation3], 256
    $region17: #{tpu_custom_call.1} parent=1 // pred_fallthru
      _
    // Predicated region
    $region18: #{tpu_custom_call.1} parent=1 // pred_check
      _
    $region19: #{tpu_custom_call.1} parent=1 // pred_check_branch
      %39 = sbr.rel (0) target = $region21
    $region20: #{tpu_custom_call.1} parent=1 // pred_region
      %40 = dma.done [#allocation6], 4096
    $region21: #{tpu_custom_call.1} parent=1 // pred_fallthru
      _
    %v41 = vld [vmem:[#allocation2] sm:$0xff]
    %v42 = vld [vmem:[#allocation2 + $0x8] sm:$0xff]
    %v43 = vld [vmem:[#allocation5] sm:$0xff]
    %v44 = vld [vmem:[#allocation5 + $0x8] sm:$0xff]
    %v45 = vld [vmem:[#allocation5 + $0x10] sm:$0xff]
    %v46 = vld [vmem:[#allocation5 + $0x18] sm:$0xff]
    %v47 = vld [vmem:[#allocation5 + $0x20] sm:$0xff]
    %v48 = vld [vmem:[#allocation5 + $0x28] sm:$0xff]
    %v49 = vld [vmem:[#allocation5 + $0x30] sm:$0xff]
    %v50 = vld [vmem:[#allocation5 + $0x38] sm:$0xff]
    %v51 = vld [vmem:[#allocation5 + $0x40] sm:$0xff]
    %v52 = vld [vmem:[#allocation5 + $0x48] sm:$0xff]
    %v53 = vld [vmem:[#allocation5 + $0x50] sm:$0xff]
    %v54 = vld [vmem:[#allocation5 + $0x58] sm:$0xff]
    %v55 = vld [vmem:[#allocation5 + $0x60] sm:$0xff]
    %v56 = vld [vmem:[#allocation5 + $0x68] sm:$0xff]
    %v57 = vld [vmem:[#allocation5 + $0x70] sm:$0xff]
    %v58 = vld [vmem:[#allocation5 + $0x78] sm:$0xff]
    %v59 = vld [vmem:[#allocation5 + $0x80] sm:$0xff]
    %v60 = vld [vmem:[#allocation5 + $0x88] sm:$0xff]
    %v61 = vld [vmem:[#allocation5 + $0x90] sm:$0xff]
    %v62 = vld [vmem:[#allocation5 + $0x98] sm:$0xff]
    %v63 = vld [vmem:[#allocation5 + $0xa0] sm:$0xff]
    %v64 = vld [vmem:[#allocation5 + $0xa8] sm:$0xff]
    %v65 = vld [vmem:[#allocation5 + $0xb0] sm:$0xff]
    %v66 = vld [vmem:[#allocation5 + $0xb8] sm:$0xff]
    %v67 = vld [vmem:[#allocation5 + $0xc0] sm:$0xff]
    %v68 = vld [vmem:[#allocation5 + $0xc8] sm:$0xff]
    %v69 = vld [vmem:[#allocation5 + $0xd0] sm:$0xff]
    %v70 = vld [vmem:[#allocation5 + $0xd8] sm:$0xff]
    %v71 = vld [vmem:[#allocation5 + $0xe0] sm:$0xff]
    %v72 = vld [vmem:[#allocation5 + $0xe8] sm:$0xff]
    %v73 = vld [vmem:[#allocation5 + $0xf0] sm:$0xff]
    %v74 = vld [vmem:[#allocation5 + $0xf8] sm:$0xff]
    %v75 = vld [vmem:[%s2] sm:$0x1]
    %v77 = vlaneseq
    %v78 = vshrl.u32 %v77, 7
    %v79 = vsub.s32 0, %v78
    %v80 = vrot.slane %v75, %v79
    %82 = vmatprep.subr.mxu0 0.0
    %83 = vmatpush1.msra.mxu0 %v43
    %84 = vmatprep.subr.mxu0 0.0
    %85 = vmatpush1.msra.mxu0 %v44
    %86 = vmatprep.subr.mxu0 0.0
    %87 = vmatpush1.msra.mxu0 %v45
    %88 = vmatprep.subr.mxu0 0.0
    %89 = vmatpush1.msra.mxu0 %v46
    %90 = vmatprep.subr.mxu0 0.0
    %91 = vmatpush1.msra.mxu0 %v47
    %92 = vmatprep.subr.mxu0 0.0
    %93 = vmatpush1.msra.mxu0 %v48
    %94 = vmatprep.subr.mxu0 0.0
    %95 = vmatpush1.msra.mxu0 %v49
    %96 = vmatprep.subr.mxu0 0.0
    %97 = vmatpush1.msra.mxu0 %v50
    %98 = vmatprep.subr.mxu0 0.0
    %99 = vmatpush1.msra.mxu0 %v51
    %100 = vmatprep.subr.mxu0 0.0
    %101 = vmatpush1.msra.mxu0 %v52
    %102 = vmatprep.subr.mxu0 0.0
    %103 = vmatpush1.msra.mxu0 %v53
    %104 = vmatprep.subr.mxu0 0.0
    %105 = vmatpush1.msra.mxu0 %v54
    %106 = vmatprep.subr.mxu0 0.0
    %107 = vmatpush1.msra.mxu0 %v55
    %108 = vmatprep.subr.mxu0 0.0
    %109 = vmatpush1.msra.mxu0 %v56
    %110 = vmatprep.subr.mxu0 0.0
    %111 = vmatpush1.msra.mxu0 %v57
    %112 = vmatprep.subr.mxu0 0.0
    %113 = vmatpush1.msra.mxu0 %v58
    %114 = vmatprep.subr.mxu0 0.0
    %115 = vmatpush1.msra.mxu0 %v59
    %116 = vmatprep.subr.mxu0 0.0
    %117 = vmatpush1.msra.mxu0 %v60
    %118 = vmatprep.subr.mxu0 0.0
    %119 = vmatpush1.msra.mxu0 %v61
    %120 = vmatprep.subr.mxu0 0.0
    %121 = vmatpush1.msra.mxu0 %v62
    %122 = vmatprep.subr.mxu0 0.0
    %123 = vmatpush1.msra.mxu0 %v63
    %124 = vmatprep.subr.mxu0 0.0
    %125 = vmatpush1.msra.mxu0 %v64
    %126 = vmatprep.subr.mxu0 0.0
    %127 = vmatpush1.msra.mxu0 %v65
    %128 = vmatprep.subr.mxu0 0.0
    %129 = vmatpush1.msra.mxu0 %v66
    %130 = vmatprep.subr.mxu0 0.0
    %131 = vmatpush1.msra.mxu0 %v67
    %132 = vmatprep.subr.mxu0 0.0
    %133 = vmatpush1.msra.mxu0 %v68
    %134 = vmatprep.subr.mxu0 0.0
    %135 = vmatpush1.msra.mxu0 %v69
    %136 = vmatprep.subr.mxu0 0.0
    %137 = vmatpush1.msra.mxu0 %v70
    %138 = vmatprep.subr.mxu0 0.0
    %139 = vmatpush1.msra.mxu0 %v71
    %140 = vmatprep.subr.mxu0 0.0
    %141 = vmatpush1.msra.mxu0 %v72
    %142 = vmatprep.subr.mxu0 0.0
    %143 = vmatpush1.msra.mxu0 %v73
    %144 = vmatprep.subr.mxu0 0.0
    %145 = vmatpush1.msra.mxu0 %v74
    %146 = vmatprep.mubr.f32.mxu0 %v42
    %147 = vmatmul.mubr.f32.gmra.mrb[0].mxu0 %v41
    %v148 = vpop.f32.mrb[0].mxu0
    %v149 = vadd.f32 %v80, %v148
    %v150 = vpop.f32.mrb[0].mxu0
    %151 = vdwg.mxu0
    %152 = vst [vmem:[#allocation7] sm:$0xff] %v149
    // Predicated region
    $region22: #{tpu_custom_call.1} parent=1 // pred_check
      _
    $region23: #{tpu_custom_call.1} parent=1 // pred_check_branch
      %154 = sbr.rel (0) target = $region25
    $region24: #{tpu_custom_call.1} parent=1 // pred_region
      %s156 = ssub.s32 128, 128
      %157 = vsyncadd [#allocation4], %s156
      %s159 = sshll.u32 [#allocation7], 4
      %s160 = int_to_ptr.vmem [resolvable:$true] %s159
      %162 = dma.vmem_to_hbm [thread:$0]  %s160, 128, %s3, [#allocation4]
    $region25: #{tpu_custom_call.1} parent=1 // pred_fallthru
      _
    // Predicated region
    $region26: #{tpu_custom_call.1} parent=1 // pred_check
      _
    $region27: #{tpu_custom_call.1} parent=1 // pred_check_branch
      %164 = sbr.rel (0) target = $region29
    $region28: #{tpu_custom_call.1} parent=1 // pred_region
      %165 = dma.done [#allocation4], 128
    $region29: #{tpu_custom_call.1} parent=1 // pred_fallthru
      _
    %166 = vsyncpa [#allocation3], 1
    %167 = vsyncpa [#allocation6], 1
    %168 = vsyncpa [#allocation4], 1

</llo_original>
